<compile_context>
chip_gen: v5e
topology: v5e:2x2
jax: 0.10.0
libtpu: 0.0.40
codegen_flags: <defaults>
</compile_context>

<pallas_src>
import functools

import numpy as np
import jax
import jax.numpy as jnp
from jax import lax
from jax.experimental import pallas as pl
from jax.experimental.pallas import tpu as pltpu

INPUT_DIM = 16
NUM_FILTERS = 10
NUM_EXTRA_CONV = 2                                   # self.num_conv_layers
LINEAR_HIDDEN = (NUM_FILTERS * INPUT_DIM, 64, 8)     # self.linear_hidden_units
Y_RANGE = (-1.0, 1.0)


def _round_up(x, m):
    return ((x + m - 1) // m) * m


def _conv1d_as_dense(w, L):
    """Dense (Cout*L, Cin*L) equivalent of Conv1d(k, stride=1, padding=k//2).

    Row index = cout*L + l, column index = cin*L + l', matching PyTorch's
    channel-major .view(-1, C*L) flatten, so each conv is a single matmul on
    the flattened activation and the conv->FC flatten is free.
    """
    Cout, Cin, K = w.shape
    pad = (K - 1) // 2
    pos = jnp.arange(L)
    m = jnp.zeros((Cout * L, Cin * L), dtype=jnp.float32)
    for t in range(K):
        src = pos + t - pad
        valid = (src >= 0) & (src < L)
        shift = jnp.zeros((L, L), jnp.float32).at[
            pos, jnp.clip(src, 0, L - 1)].set(valid.astype(jnp.float32))
        m = m + jnp.kron(w[:, :, t].astype(jnp.float32), shift)
    return m


def _cnn_fused_kernel(x_ref, m1_ref, c1_ref, m2_ref, c2_ref, m3_ref, c3_ref,
                      w4_ref, c4_ref, w5_ref, c5_ref, o_ref, *, y_range):
    """Full forward pass for one (feature, B_tile) batch block."""
    f32 = jnp.float32

    def layer(w_ref, c_ref, a):
        return jnp.maximum(
            jnp.dot(w_ref[...], a, preferred_element_type=f32) + c_ref[...],
            0.0)

    a = x_ref[...]                       # (L, Bt)
    a = layer(m1_ref, c1_ref, a)         # (C*L, Bt)  conv1 + ReLU
    a = layer(m2_ref, c2_ref, a)         # (C*L, Bt)  conv2 + ReLU
    a = layer(m3_ref, c3_ref, a)         # (C*L, Bt)  conv3 + ReLU
    a = layer(w4_ref, c4_ref, a)         # (64, Bt)   fc1 + ReLU
    y = layer(w5_ref, c5_ref, a)         # (8, Bt)    fc2 + ReLU
    if y_range:
        lo, hi = y_range
        y = lo + (hi - lo) * (1.0 / (1.0 + jnp.exp(-y)))   # sigmoid on EUP
    o_ref[...] = y


@jax.jit
def cnn_forward(x, params):
    """x: (B, input_dim) float32, params: dict of PyTorch-layout weights."""
    B = x.shape[0]
    L = INPUT_DIM
    C = NUM_FILTERS
    n_out = LINEAR_HIDDEN[-1]

    (w0, b0), (w1, b1), (w2, b2) = params["conv"]
    (fw1, fb1), (fw2, fb2) = params["fc"]

    # Wrapper-side weight plumbing (tiny, layout only, fused under jit).
    m1 = _conv1d_as_dense(w0, L)                              # (160, 16)
    m2 = _conv1d_as_dense(w1, L)                              # (160, 160)
    m3 = _conv1d_as_dense(w2, L)                              # (160, 160)
    c1 = jnp.repeat(b0.astype(jnp.float32), L).reshape(C * L, 1)
    c2 = jnp.repeat(b1.astype(jnp.float32), L).reshape(C * L, 1)
    c3 = jnp.repeat(b2.astype(jnp.float32), L).reshape(C * L, 1)
    w4 = fw1.astype(jnp.float32)                              # (64, 160)
    w5 = fw2.astype(jnp.float32)                              # (8, 64)
    c4 = fb1.astype(jnp.float32).reshape(-1, 1)
    c5 = fb2.astype(jnp.float32).reshape(-1, 1)

    # Batch on lanes: pad to a lane-friendly size and tile the grid over it.
    # Compute per block is tiny vs ~0.35us grid-step overhead, so prefer the
    # largest tile that keeps VMEM small; only tile when the batch is big,
    # and then keep >= 2 blocks so v7x megacore can shard the parallel axis.
    b_pad = _round_up(max(B, 1), 128)
    if b_pad <= 2048:
        b_tile = b_pad                  # whole (padded) batch in one block
    else:
        b_tile = 1024                   # >= 3 parallel blocks
        b_pad = _round_up(b_pad, b_tile)
    nb = b_pad // b_tile

    xt = jnp.zeros((L, b_pad), jnp.float32).at[:, :B].set(
        x.astype(jnp.float32).T)

    const = lambda i: (0, 0)
    out_t = pl.pallas_call(
        functools.partial(_cnn_fused_kernel, y_range=Y_RANGE),
        out_shape=jax.ShapeDtypeStruct((n_out, b_pad), jnp.float32),
        grid=(nb,),
        in_specs=[
            pl.BlockSpec((L, b_tile), lambda i: (0, i)),
            pl.BlockSpec(m1.shape, const), pl.BlockSpec(c1.shape, const),
            pl.BlockSpec(m2.shape, const), pl.BlockSpec(c2.shape, const),
            pl.BlockSpec(m3.shape, const), pl.BlockSpec(c3.shape, const),
            pl.BlockSpec(w4.shape, const), pl.BlockSpec(c4.shape, const),
            pl.BlockSpec(w5.shape, const), pl.BlockSpec(c5.shape, const),
        ],
        out_specs=pl.BlockSpec((n_out, b_tile), lambda i: (0, i)),
        compiler_params=pltpu.CompilerParams(
            dimension_semantics=("parallel",)),
    )(xt, m1, c1, m2, c2, m3, c3, w4, c4, w5, c5)

    return out_t[:, :B].T                                     # (B, 8)


def ref_forward(x, params):
    """Pure-JAX reference matching the PyTorch forward semantics."""
    B = x.shape[0]
    a = x.reshape(B, 1, INPUT_DIM)
    for w, b in params["conv"]:
        a = lax.conv_general_dilated(
            a, w, window_strides=(1,), padding=((1, 1),),
            dimension_numbers=("NCH", "OIH", "NCH"))
        a = jnp.maximum(a + b[None, :, None], 0.0)
    a = a.reshape(B, NUM_FILTERS * INPUT_DIM)
    for w, b in params["fc"]:
        a = jnp.maximum(a @ w.T + b[None, :], 0.0)
    if Y_RANGE:
        a = Y_RANGE[0] + (Y_RANGE[1] - Y_RANGE[0]) * jax.nn.sigmoid(a)
    return a


if __name__ == "__main__":
    key = jax.random.PRNGKey(0)
    keys = jax.random.split(key, 11)

    def nrm(k, shape, scale=0.2):
        return scale * jax.random.normal(k, shape, dtype=jnp.float32)

    params = {
        "conv": [
            (nrm(keys[0], (NUM_FILTERS, 1, 3)), nrm(keys[1], (NUM_FILTERS,))),
            (nrm(keys[2], (NUM_FILTERS, NUM_FILTERS, 3)),
             nrm(keys[3], (NUM_FILTERS,))),
            (nrm(keys[4], (NUM_FILTERS, NUM_FILTERS, 3)),
             nrm(keys[5], (NUM_FILTERS,))),
        ],
        "fc": [
            (nrm(keys[6], (LINEAR_HIDDEN[1], LINEAR_HIDDEN[0])),
             nrm(keys[7], (LINEAR_HIDDEN[1],))),
            (nrm(keys[8], (LINEAR_HIDDEN[2], LINEAR_HIDDEN[1])),
             nrm(keys[9], (LINEAR_HIDDEN[2],))),
        ],
    }

    # Small batch (the spec's example scale).
    x = jax.random.normal(keys[10], (2, INPUT_DIM), dtype=jnp.float32)
    out = jax.block_until_ready(cnn_forward(x, params))
    ref = ref_forward(x, params)
    assert out.shape == (2, LINEAR_HIDDEN[-1])
    np.testing.assert_allclose(np.asarray(out), np.asarray(ref),
                               rtol=1e-4, atol=1e-4)

    # Also exercise the batch-padding path (non multiple of 128).
    x2 = jax.random.normal(keys[10], (300, INPUT_DIM), dtype=jnp.float32)
    out2 = jax.block_until_ready(cnn_forward(x2, params))
    ref2 = ref_forward(x2, params)
    np.testing.assert_allclose(np.asarray(out2), np.asarray(ref2),
                               rtol=1e-4, atol=1e-4)

    # And the multi-block (tiled, parallel grid) path.
    x3 = jax.random.normal(keys[10], (3000, INPUT_DIM), dtype=jnp.float32)
    out3 = jax.block_until_ready(cnn_forward(x3, params))
    ref3 = ref_forward(x3, params)
    np.testing.assert_allclose(np.asarray(out3), np.asarray(ref3),
                               rtol=1e-4, atol=1e-4)

    print("KERNEL_OK")
</pallas_src>

<mosaic_0001>
module attributes {stable_mosaic.version = 11 : i64} {
  func.func @_cnn_fused_kernel(%arg0: i32, %arg1: memref<16x128xf32, #tpu.memory_space<vmem>>, %arg2: memref<160x16xf32, #tpu.memory_space<vmem>>, %arg3: memref<160x1xf32, #tpu.memory_space<vmem>>, %arg4: memref<160x160xf32, #tpu.memory_space<vmem>>, %arg5: memref<160x1xf32, #tpu.memory_space<vmem>>, %arg6: memref<160x160xf32, #tpu.memory_space<vmem>>, %arg7: memref<160x1xf32, #tpu.memory_space<vmem>>, %arg8: memref<64x160xf32, #tpu.memory_space<vmem>>, %arg9: memref<64x1xf32, #tpu.memory_space<vmem>>, %arg10: memref<8x64xf32, #tpu.memory_space<vmem>>, %arg11: memref<8x1xf32, #tpu.memory_space<vmem>>, %arg12: memref<8x128xf32, #tpu.memory_space<vmem>>) attributes {dimension_semantics = [#tpu.dimension_semantics<parallel>], iteration_bounds = array<i64: 1>, scalar_prefetch = 0 : i64, scratch_operands = 0 : i64, tpu.core_type = #tpu.core_type<tc>, window_params = [{transform_indices = @transform_0, window_bounds = array<i64: 16, 128>}, {pipeline_mode = #tpu.pipeline_mode<synchronous>, transform_indices = @transform_1, window_bounds = array<i64: 160, 16>}, {pipeline_mode = #tpu.pipeline_mode<synchronous>, transform_indices = @transform_2, window_bounds = array<i64: 160, 1>}, {pipeline_mode = #tpu.pipeline_mode<synchronous>, transform_indices = @transform_3, window_bounds = array<i64: 160, 160>}, {pipeline_mode = #tpu.pipeline_mode<synchronous>, transform_indices = @transform_4, window_bounds = array<i64: 160, 1>}, {pipeline_mode = #tpu.pipeline_mode<synchronous>, transform_indices = @transform_5, window_bounds = array<i64: 160, 160>}, {pipeline_mode = #tpu.pipeline_mode<synchronous>, transform_indices = @transform_6, window_bounds = array<i64: 160, 1>}, {pipeline_mode = #tpu.pipeline_mode<synchronous>, transform_indices = @transform_7, window_bounds = array<i64: 64, 160>}, {pipeline_mode = #tpu.pipeline_mode<synchronous>, transform_indices = @transform_8, window_bounds = array<i64: 64, 1>}, {pipeline_mode = #tpu.pipeline_mode<synchronous>, transform_indices = @transform_9, window_bounds = array<i64: 8, 64>}, {pipeline_mode = #tpu.pipeline_mode<synchronous>, transform_indices = @transform_10, window_bounds = array<i64: 8, 1>}, {transform_indices = @transform_11, window_bounds = array<i64: 8, 128>}]} {
    %c0 = arith.constant 0 : index
    %c0_0 = arith.constant 0 : index
    %0 = vector.load %arg1[%c0, %c0_0] : memref<16x128xf32, #tpu.memory_space<vmem>>, vector<16x128xf32>
    %c0_1 = arith.constant 0 : index
    %c0_2 = arith.constant 0 : index
    %1 = vector.load %arg2[%c0_1, %c0_2] : memref<160x16xf32, #tpu.memory_space<vmem>>, vector<160x16xf32>
    %cst = arith.constant dense<0.000000e+00> : vector<160x128xf32>
    %2 = tpu.matmul %1, %0, %cst {dimension_numbers = #tpu.dot_dimension_numbers<[1], [0], [0], [1], [0, 0, 1, 1], [], []>} : vector<160x16xf32>, vector<16x128xf32>, vector<160x128xf32> -> vector<160x128xf32>
    %c0_3 = arith.constant 0 : index
    %c0_4 = arith.constant 0 : index
    %3 = vector.load %arg3[%c0_3, %c0_4] : memref<160x1xf32, #tpu.memory_space<vmem>>, vector<160x1xf32>
    %4 = vector.broadcast %3 : vector<160x1xf32> to vector<160x128xf32>
    %5 = arith.addf %2, %4 : vector<160x128xf32>
    %cst_5 = arith.constant 0.000000e+00 : f32
    %6 = vector.broadcast %cst_5 : f32 to vector<160x128xf32>
    %7 = arith.maximumf %5, %6 : vector<160x128xf32>
    %c0_6 = arith.constant 0 : index
    %c0_7 = arith.constant 0 : index
    %8 = vector.load %arg4[%c0_6, %c0_7] : memref<160x160xf32, #tpu.memory_space<vmem>>, vector<160x160xf32>
    %cst_8 = arith.constant dense<0.000000e+00> : vector<160x128xf32>
    %9 = tpu.matmul %8, %7, %cst_8 {dimension_numbers = #tpu.dot_dimension_numbers<[1], [0], [0], [1], [0, 0, 1, 1], [], []>} : vector<160x160xf32>, vector<160x128xf32>, vector<160x128xf32> -> vector<160x128xf32>
    %c0_9 = arith.constant 0 : index
    %c0_10 = arith.constant 0 : index
    %10 = vector.load %arg5[%c0_9, %c0_10] : memref<160x1xf32, #tpu.memory_space<vmem>>, vector<160x1xf32>
    %11 = vector.broadcast %10 : vector<160x1xf32> to vector<160x128xf32>
    %12 = arith.addf %9, %11 : vector<160x128xf32>
    %cst_11 = arith.constant 0.000000e+00 : f32
    %13 = vector.broadcast %cst_11 : f32 to vector<160x128xf32>
    %14 = arith.maximumf %12, %13 : vector<160x128xf32>
    %c0_12 = arith.constant 0 : index
    %c0_13 = arith.constant 0 : index
    %15 = vector.load %arg6[%c0_12, %c0_13] : memref<160x160xf32, #tpu.memory_space<vmem>>, vector<160x160xf32>
    %cst_14 = arith.constant dense<0.000000e+00> : vector<160x128xf32>
    %16 = tpu.matmul %15, %14, %cst_14 {dimension_numbers = #tpu.dot_dimension_numbers<[1], [0], [0], [1], [0, 0, 1, 1], [], []>} : vector<160x160xf32>, vector<160x128xf32>, vector<160x128xf32> -> vector<160x128xf32>
    %c0_15 = arith.constant 0 : index
    %c0_16 = arith.constant 0 : index
    %17 = vector.load %arg7[%c0_15, %c0_16] : memref<160x1xf32, #tpu.memory_space<vmem>>, vector<160x1xf32>
    %18 = vector.broadcast %17 : vector<160x1xf32> to vector<160x128xf32>
    %19 = arith.addf %16, %18 : vector<160x128xf32>
    %cst_17 = arith.constant 0.000000e+00 : f32
    %20 = vector.broadcast %cst_17 : f32 to vector<160x128xf32>
    %21 = arith.maximumf %19, %20 : vector<160x128xf32>
    %c0_18 = arith.constant 0 : index
    %c0_19 = arith.constant 0 : index
    %22 = vector.load %arg8[%c0_18, %c0_19] : memref<64x160xf32, #tpu.memory_space<vmem>>, vector<64x160xf32>
    %cst_20 = arith.constant dense<0.000000e+00> : vector<64x128xf32>
    %23 = tpu.matmul %22, %21, %cst_20 {dimension_numbers = #tpu.dot_dimension_numbers<[1], [0], [0], [1], [0, 0, 1, 1], [], []>} : vector<64x160xf32>, vector<160x128xf32>, vector<64x128xf32> -> vector<64x128xf32>
    %c0_21 = arith.constant 0 : index
    %c0_22 = arith.constant 0 : index
    %24 = vector.load %arg9[%c0_21, %c0_22] : memref<64x1xf32, #tpu.memory_space<vmem>>, vector<64x1xf32>
    %25 = vector.broadcast %24 : vector<64x1xf32> to vector<64x128xf32>
    %26 = arith.addf %23, %25 : vector<64x128xf32>
    %cst_23 = arith.constant 0.000000e+00 : f32
    %27 = vector.broadcast %cst_23 : f32 to vector<64x128xf32>
    %28 = arith.maximumf %26, %27 : vector<64x128xf32>
    %c0_24 = arith.constant 0 : index
    %c0_25 = arith.constant 0 : index
    %29 = vector.load %arg10[%c0_24, %c0_25] : memref<8x64xf32, #tpu.memory_space<vmem>>, vector<8x64xf32>
    %cst_26 = arith.constant dense<0.000000e+00> : vector<8x128xf32>
    %30 = tpu.matmul %29, %28, %cst_26 {dimension_numbers = #tpu.dot_dimension_numbers<[1], [0], [0], [1], [0, 0, 1, 1], [], []>} : vector<8x64xf32>, vector<64x128xf32>, vector<8x128xf32> -> vector<8x128xf32>
    %c0_27 = arith.constant 0 : index
    %c0_28 = arith.constant 0 : index
    %31 = vector.load %arg11[%c0_27, %c0_28] : memref<8x1xf32, #tpu.memory_space<vmem>>, vector<8x1xf32>
    %32 = vector.broadcast %31 : vector<8x1xf32> to vector<8x128xf32>
    %33 = arith.addf %30, %32 : vector<8x128xf32>
    %cst_29 = arith.constant 0.000000e+00 : f32
    %34 = vector.broadcast %cst_29 : f32 to vector<8x128xf32>
    %35 = arith.maximumf %33, %34 : vector<8x128xf32>
    %cst_30 = arith.constant 0.000000e+00 : f32
    %36 = vector.broadcast %cst_30 : f32 to vector<8x128xf32>
    %37 = arith.subf %36, %35 : vector<8x128xf32>
    %38 = math.exp %37 : vector<8x128xf32>
    %cst_31 = arith.constant 1.000000e+00 : f32
    %39 = vector.broadcast %cst_31 : f32 to vector<8x128xf32>
    %40 = arith.addf %39, %38 : vector<8x128xf32>
    %cst_32 = arith.constant 1.000000e+00 : f32
    %41 = vector.broadcast %cst_32 : f32 to vector<8x128xf32>
    %42 = arith.divf %41, %40 : vector<8x128xf32>
    %cst_33 = arith.constant 2.000000e+00 : f32
    %43 = vector.broadcast %cst_33 : f32 to vector<8x128xf32>
    %44 = arith.mulf %43, %42 : vector<8x128xf32>
    %cst_34 = arith.constant -1.000000e+00 : f32
    %45 = vector.broadcast %cst_34 : f32 to vector<8x128xf32>
    %46 = arith.addf %45, %44 : vector<8x128xf32>
    %c0_35 = arith.constant 0 : index
    %c0_36 = arith.constant 0 : index
    %47 = vector.load %arg12[%c0_35, %c0_36] : memref<8x128xf32, #tpu.memory_space<vmem>>, vector<8x128xf32>
    tpu.vector_store %arg12[%c0_35, %c0_36], %46 {strides = array<i32>} : memref<8x128xf32, #tpu.memory_space<vmem>>, vector<8x128xf32>,
    return
  }
  func.func @transform_0(%arg0: i32) -> (i32, i32) {
    %c0_i32 = arith.constant 0 : i32
    %c0_i32_0 = arith.constant 0 : i32
    return %c0_i32, %arg0 : i32, i32
  }
  func.func @transform_1(%arg0: i32) -> (i32, i32) {
    %c0_i32 = arith.constant 0 : i32
    %c0_i32_0 = arith.constant 0 : i32
    %c0_i32_1 = arith.constant 0 : i32
    return %c0_i32, %c0_i32_0 : i32, i32
  }
  func.func @transform_2(%arg0: i32) -> (i32, i32) {
    %c0_i32 = arith.constant 0 : i32
    %c0_i32_0 = arith.constant 0 : i32
    %c0_i32_1 = arith.constant 0 : i32
    return %c0_i32, %c0_i32_0 : i32, i32
  }
  func.func @transform_3(%arg0: i32) -> (i32, i32) {
    %c0_i32 = arith.constant 0 : i32
    %c0_i32_0 = arith.constant 0 : i32
    %c0_i32_1 = arith.constant 0 : i32
    return %c0_i32, %c0_i32_0 : i32, i32
  }
  func.func @transform_4(%arg0: i32) -> (i32, i32) {
    %c0_i32 = arith.constant 0 : i32
    %c0_i32_0 = arith.constant 0 : i32
    %c0_i32_1 = arith.constant 0 : i32
    return %c0_i32, %c0_i32_0 : i32, i32
  }
  func.func @transform_5(%arg0: i32) -> (i32, i32) {
    %c0_i32 = arith.constant 0 : i32
    %c0_i32_0 = arith.constant 0 : i32
    %c0_i32_1 = arith.constant 0 : i32
    return %c0_i32, %c0_i32_0 : i32, i32
  }
  func.func @transform_6(%arg0: i32) -> (i32, i32) {
    %c0_i32 = arith.constant 0 : i32
    %c0_i32_0 = arith.constant 0 : i32
    %c0_i32_1 = arith.constant 0 : i32
    return %c0_i32, %c0_i32_0 : i32, i32
  }
  func.func @transform_7(%arg0: i32) -> (i32, i32) {
    %c0_i32 = arith.constant 0 : i32
    %c0_i32_0 = arith.constant 0 : i32
    %c0_i32_1 = arith.constant 0 : i32
    return %c0_i32, %c0_i32_0 : i32, i32
  }
  func.func @transform_8(%arg0: i32) -> (i32, i32) {
    %c0_i32 = arith.constant 0 : i32
    %c0_i32_0 = arith.constant 0 : i32
    %c0_i32_1 = arith.constant 0 : i32
    return %c0_i32, %c0_i32_0 : i32, i32
  }
  func.func @transform_9(%arg0: i32) -> (i32, i32) {
    %c0_i32 = arith.constant 0 : i32
    %c0_i32_0 = arith.constant 0 : i32
    %c0_i32_1 = arith.constant 0 : i32
    return %c0_i32, %c0_i32_0 : i32, i32
  }
  func.func @transform_10(%arg0: i32) -> (i32, i32) {
    %c0_i32 = arith.constant 0 : i32
    %c0_i32_0 = arith.constant 0 : i32
    %c0_i32_1 = arith.constant 0 : i32
    return %c0_i32, %c0_i32_0 : i32, i32
  }
  func.func @transform_11(%arg0: i32) -> (i32, i32) {
    %c0_i32 = arith.constant 0 : i32
    %c0_i32_0 = arith.constant 0 : i32
    return %c0_i32, %arg0 : i32, i32
  }
}

</mosaic_0001>

<llo_original>
// kernel: cnn_forward.1
$region0: #{cnn_forward.1}
  #allocation0 [shape = 'u32[]', space=smem, size = 0x4, offset = 0x4, fixed_abs, tag = 'smem constant byte address 0x4 - core index']
  #allocation1 [shape = 'u32[72,128]{1,0:T(1,128)}', space=vmem, size = 0x9000, scoped, tag = 'internal scratch']
  %s0 = inlined_call_operand.vmem [shape: f32[16,128], index: 0, kind: input, shape index: {}]
  %s1 = inlined_call_operand.vmem [shape: f32[160,16], index: 1, kind: input, shape index: {}]
  %s2 = inlined_call_operand.vmem [shape: f32[160,1], index: 2, kind: input, shape index: {}]
  %s3 = inlined_call_operand.vmem [shape: f32[160,160], index: 3, kind: input, shape index: {}]
  %s4 = inlined_call_operand.vmem [shape: f32[160,1], index: 4, kind: input, shape index: {}]
  %s5 = inlined_call_operand.vmem [shape: f32[160,160], index: 5, kind: input, shape index: {}]
  %s6 = inlined_call_operand.vmem [shape: f32[160,1], index: 6, kind: input, shape index: {}]
  %s7 = inlined_call_operand.vmem [shape: f32[64,160], index: 7, kind: input, shape index: {}]
  %s8 = inlined_call_operand.vmem [shape: f32[64,1], index: 8, kind: input, shape index: {}]
  %s9 = inlined_call_operand.vmem [shape: f32[8,64], index: 9, kind: input, shape index: {}]
  %s10 = inlined_call_operand.vmem [shape: f32[8,1], index: 10, kind: input, shape index: {}]
  %s11 = inlined_call_operand.vmem [shape: f32[8,128], index: 11, kind: output, shape index: {}]
  %s12 = sld [smem:[#allocation0]]
  $region54: #{cnn_forward.1} parent=0
    _
  %s14 = ssub.s32 1, %s12
  %s15 = scalar_select 0, %s14, %s12
  // Predicated region
  $region2: #{cnn_forward.1} parent=0 // pred_check
    _
  $region3: #{cnn_forward.1} parent=0 // pred_check_branch
    %17 = sbr.rel (0) target = $region5
  $region4: #{cnn_forward.1} parent=0 // pred_region
    _
  $region5: #{cnn_forward.1} parent=0 // pred_fallthru
    _
  // Predicated region
  $region6: #{cnn_forward.1} parent=0 // pred_check
    _
  $region7: #{cnn_forward.1} parent=0 // pred_check_branch
    %19 = sbr.rel (0) target = $region9
  $region8: #{cnn_forward.1} parent=0 // pred_region
    _
  $region9: #{cnn_forward.1} parent=0 // pred_fallthru
    _
  // Predicated region
  $region10: #{cnn_forward.1} parent=0 // pred_check
    _
  $region11: #{cnn_forward.1} parent=0 // pred_check_branch
    %21 = sbr.rel (0) target = $region13
  $region12: #{cnn_forward.1} parent=0 // pred_region
    _
  $region13: #{cnn_forward.1} parent=0 // pred_fallthru
    _
  // Predicated region
  $region14: #{cnn_forward.1} parent=0 // pred_check
    _
  $region15: #{cnn_forward.1} parent=0 // pred_check_branch
    %23 = sbr.rel (0) target = $region17
  $region16: #{cnn_forward.1} parent=0 // pred_region
    _
  $region17: #{cnn_forward.1} parent=0 // pred_fallthru
    _
  // Predicated region
  $region18: #{cnn_forward.1} parent=0 // pred_check
    _
  $region19: #{cnn_forward.1} parent=0 // pred_check_branch
    %25 = sbr.rel (0) target = $region21
  $region20: #{cnn_forward.1} parent=0 // pred_region
    _
  $region21: #{cnn_forward.1} parent=0 // pred_fallthru
    _
  // Predicated region
  $region22: #{cnn_forward.1} parent=0 // pred_check
    _
  $region23: #{cnn_forward.1} parent=0 // pred_check_branch
    %27 = sbr.rel (0) target = $region25
  $region24: #{cnn_forward.1} parent=0 // pred_region
    _
  $region25: #{cnn_forward.1} parent=0 // pred_fallthru
    _
  // Predicated region
  $region26: #{cnn_forward.1} parent=0 // pred_check
    _
  $region27: #{cnn_forward.1} parent=0 // pred_check_branch
    %29 = sbr.rel (0) target = $region29
  $region28: #{cnn_forward.1} parent=0 // pred_region
    _
  $region29: #{cnn_forward.1} parent=0 // pred_fallthru
    _
  // Predicated region
  $region30: #{cnn_forward.1} parent=0 // pred_check
    _
  $region31: #{cnn_forward.1} parent=0 // pred_check_branch
    %31 = sbr.rel (0) target = $region33
  $region32: #{cnn_forward.1} parent=0 // pred_region
    _
  $region33: #{cnn_forward.1} parent=0 // pred_fallthru
    _
  // Predicated region
  $region34: #{cnn_forward.1} parent=0 // pred_check
    _
  $region35: #{cnn_forward.1} parent=0 // pred_check_branch
    %33 = sbr.rel (0) target = $region37
  $region36: #{cnn_forward.1} parent=0 // pred_region
    _
  $region37: #{cnn_forward.1} parent=0 // pred_fallthru
    _
  // Predicated region
  $region38: #{cnn_forward.1} parent=0 // pred_check
    _
  $region39: #{cnn_forward.1} parent=0 // pred_check_branch
    %35 = sbr.rel (0) target = $region41
  $region40: #{cnn_forward.1} parent=0 // pred_region
    _
  $region41: #{cnn_forward.1} parent=0 // pred_fallthru
    _
  // Predicated region
  $region42: #{cnn_forward.1} parent=0 // pred_check
    _
  $region43: #{cnn_forward.1} parent=0 // pred_check_branch
    %37 = sbr.rel (0) target = $region45
  $region44: #{cnn_forward.1} parent=0 // pred_region
    _
  $region45: #{cnn_forward.1} parent=0 // pred_fallthru
    _
  %v38 = vld [vmem:[%s0] sm:$0xff]
  %v39 = vld [vmem:[%s0 + $0x8] sm:$0xff]
  %v40 = vld [vmem:[%s1] sm:$0xff]
  %v41 = vld [vmem:[%s1 + $0x8] sm:$0xff]
  %v42 = vld [vmem:[%s1 + $0x10] sm:$0xff]
  %v43 = vld [vmem:[%s1 + $0x18] sm:$0xff]
  %v44 = vld [vmem:[%s1 + $0x20] sm:$0xff]
  %v45 = vld [vmem:[%s1 + $0x28] sm:$0xff]
  %v46 = vld [vmem:[%s1 + $0x30] sm:$0xff]
  %v47 = vld [vmem:[%s1 + $0x38] sm:$0xff]
  %v48 = vld [vmem:[%s1 + $0x40] sm:$0xff]
  %v49 = vld [vmem:[%s1 + $0x48] sm:$0xff]
  %v50 = vld [vmem:[%s1 + $0x50] sm:$0xff]
  %v51 = vld [vmem:[%s1 + $0x58] sm:$0xff]
  %v52 = vld [vmem:[%s1 + $0x60] sm:$0xff]
  %v53 = vld [vmem:[%s1 + $0x68] sm:$0xff]
  %v54 = vld [vmem:[%s1 + $0x70] sm:$0xff]
  %v55 = vld [vmem:[%s1 + $0x78] sm:$0xff]
  %v56 = vld [vmem:[%s1 + $0x80] sm:$0xff]
  %v57 = vld [vmem:[%s1 + $0x88] sm:$0xff]
  %v58 = vld [vmem:[%s1 + $0x90] sm:$0xff]
  %v59 = vld [vmem:[%s1 + $0x98] sm:$0xff]
  %v60 = vld [vmem:[%s2] sm:$0xff]
  %v61 = vld [vmem:[%s2 + $0x8] sm:$0xff]
  %v62 = vld [vmem:[%s2 + $0x10] sm:$0xff]
  %v63 = vld [vmem:[%s2 + $0x18] sm:$0xff]
  %v64 = vld [vmem:[%s2 + $0x20] sm:$0xff]
  %v65 = vld [vmem:[%s2 + $0x28] sm:$0xff]
  %v66 = vld [vmem:[%s2 + $0x30] sm:$0xff]
  %v67 = vld [vmem:[%s2 + $0x38] sm:$0xff]
  %v68 = vld [vmem:[%s2 + $0x40] sm:$0xff]
  %v69 = vld [vmem:[%s2 + $0x48] sm:$0xff]
  %v70 = vld [vmem:[%s2 + $0x50] sm:$0xff]
  %v71 = vld [vmem:[%s2 + $0x58] sm:$0xff]
  %v72 = vld [vmem:[%s2 + $0x60] sm:$0xff]
  %v73 = vld [vmem:[%s2 + $0x68] sm:$0xff]
  %v74 = vld [vmem:[%s2 + $0x70] sm:$0xff]
  %v75 = vld [vmem:[%s2 + $0x78] sm:$0xff]
  %v76 = vld [vmem:[%s2 + $0x80] sm:$0xff]
  %v77 = vld [vmem:[%s2 + $0x88] sm:$0xff]
  %v78 = vld [vmem:[%s2 + $0x90] sm:$0xff]
  %v79 = vld [vmem:[%s2 + $0x98] sm:$0xff]
  %81 = vset.pattern.permute.xlu0 0
  %82 = vperm.xlu0 %81, %v60
  %v83 = vpop.permute.xlu0 %82
  %86 = vset.pattern.permute.xlu0 0
  %87 = vperm.xlu0 %86, %v61
  %v88 = vpop.permute.xlu0 %87
  %91 = vset.pattern.permute.xlu0 0
  %92 = vperm.xlu0 %91, %v62
  %v93 = vpop.permute.xlu0 %92
  %96 = vset.pattern.permute.xlu0 0
  %97 = vperm.xlu0 %96, %v63
  %v98 = vpop.permute.xlu0 %97
  %101 = vset.pattern.permute.xlu0 0
  %102 = vperm.xlu0 %101, %v64
  %v103 = vpop.permute.xlu0 %102
  %106 = vset.pattern.permute.xlu0 0
  %107 = vperm.xlu0 %106, %v65
  %v108 = vpop.permute.xlu0 %107
  %111 = vset.pattern.permute.xlu0 0
  %112 = vperm.xlu0 %111, %v66
  %v113 = vpop.permute.xlu0 %112
  %116 = vset.pattern.permute.xlu0 0
  %117 = vperm.xlu0 %116, %v67
  %v118 = vpop.permute.xlu0 %117
  %121 = vset.pattern.permute.xlu0 0
  %122 = vperm.xlu0 %121, %v68
  %v123 = vpop.permute.xlu0 %122
  %126 = vset.pattern.permute.xlu0 0
  %127 = vperm.xlu0 %126, %v69
  %v128 = vpop.permute.xlu0 %127
  %131 = vset.pattern.permute.xlu0 0
  %132 = vperm.xlu0 %131, %v70
  %v133 = vpop.permute.xlu0 %132
  %136 = vset.pattern.permute.xlu0 0
  %137 = vperm.xlu0 %136, %v71
  %v138 = vpop.permute.xlu0 %137
  %141 = vset.pattern.permute.xlu0 0
  %142 = vperm.xlu0 %141, %v72
  %v143 = vpop.permute.xlu0 %142
  %146 = vset.pattern.permute.xlu0 0
  %147 = vperm.xlu0 %146, %v73
  %v148 = vpop.permute.xlu0 %147
  %151 = vset.pattern.permute.xlu0 0
  %152 = vperm.xlu0 %151, %v74
  %v153 = vpop.permute.xlu0 %152
  %156 = vset.pattern.permute.xlu0 0
  %157 = vperm.xlu0 %156, %v75
  %v158 = vpop.permute.xlu0 %157
  %161 = vset.pattern.permute.xlu0 0
  %162 = vperm.xlu0 %161, %v76
  %v163 = vpop.permute.xlu0 %162
  %166 = vset.pattern.permute.xlu0 0
  %167 = vperm.xlu0 %166, %v77
  %v168 = vpop.permute.xlu0 %167
  %171 = vset.pattern.permute.xlu0 0
  %172 = vperm.xlu0 %171, %v78
  %v173 = vpop.permute.xlu0 %172
  %176 = vset.pattern.permute.xlu0 0
  %177 = vperm.xlu0 %176, %v79
  %v178 = vpop.permute.xlu0 %177
  %vm180 = vcmask 130048
  %v182 = vsel %vm180, %v40, 0
  %v185 = vsel %vm180, %v41, 0
  %v188 = vsel %vm180, %v42, 0
  %v191 = vsel %vm180, %v43, 0
  %v194 = vsel %vm180, %v44, 0
  %v197 = vsel %vm180, %v45, 0
  %v200 = vsel %vm180, %v46, 0
  %v203 = vsel %vm180, %v47, 0
  %v206 = vsel %vm180, %v48, 0
  %v209 = vsel %vm180, %v49, 0
  %v212 = vsel %vm180, %v50, 0
  %v215 = vsel %vm180, %v51, 0
  %v218 = vsel %vm180, %v52, 0
  %v221 = vsel %vm180, %v53, 0
  %v224 = vsel %vm180, %v54, 0
  %v227 = vsel %vm180, %v55, 0
  %v230 = vsel %vm180, %v56, 0
  %v233 = vsel %vm180, %v57, 0
  %v236 = vsel %vm180, %v58, 0
  %v239 = vsel %vm180, %v59, 0
  %241 = vmatpush.msra.mxu0 0.0
  %242 = vmatpush.msra.mxu0 0.0
  %243 = vmatpush.msra.mxu0 0.0
  %244 = vmatpush.msra.mxu0 0.0
  %245 = vmatpush.msra.mxu0 0.0
  %246 = vmatpush.msra.mxu0 0.0
  %247 = vmatpush.msra.mxu0 0.0
  %248 = vmatpush.msra.mxu0 0.0
  %249 = vmatpush.msra.mxu0 0.0
  %250 = vmatpush.msra.mxu0 0.0
  %251 = vmatpush.msra.mxu0 0.0
  %252 = vmatpush.msra.mxu0 0.0
  %253 = vmatpush.msra.mxu0 0.0
  %254 = vmatpush.msra.mxu0 0.0
  %255 = vmatpush.msra.mxu0 %v39
  %256 = vmatpush.msra.mxu0 %v38
  %257 = vmatmul.f32.gmra.mxu0 %v182
  %v258 = vpop.f32.mrf.mxu0
  %v259 = vadd.f32 %v83, %v258
  %260 = vmatmul.f32.gmra.mxu0 %v185
  %v261 = vpop.f32.mrf.mxu0
  %v262 = vadd.f32 %v88, %v261
  %263 = vmatmul.f32.gmra.mxu0 %v188
  %v264 = vpop.f32.mrf.mxu0
  %v265 = vadd.f32 %v93, %v264
  %266 = vmatmul.f32.gmra.mxu0 %v191
  %v267 = vpop.f32.mrf.mxu0
  %v268 = vadd.f32 %v98, %v267
  %269 = vmatmul.f32.gmra.mxu0 %v194
  %v270 = vpop.f32.mrf.mxu0
  %v271 = vadd.f32 %v103, %v270
  %272 = vmatmul.f32.gmra.mxu0 %v197
  %v273 = vpop.f32.mrf.mxu0
  %v274 = vadd.f32 %v108, %v273
  %275 = vmatmul.f32.gmra.mxu0 %v200
  %v276 = vpop.f32.mrf.mxu0
  %v277 = vadd.f32 %v113, %v276
  %278 = vmatmul.f32.gmra.mxu0 %v203
  %v279 = vpop.f32.mrf.mxu0
  %v280 = vadd.f32 %v118, %v279
  %281 = vmatmul.f32.gmra.mxu0 %v206
  %v282 = vpop.f32.mrf.mxu0
  %v283 = vadd.f32 %v123, %v282
  %284 = vmatmul.f32.gmra.mxu0 %v209
  %v285 = vpop.f32.mrf.mxu0
  %v286 = vadd.f32 %v128, %v285
  %287 = vmatmul.f32.gmra.mxu0 %v212
  %v288 = vpop.f32.mrf.mxu0
  %v289 = vadd.f32 %v133, %v288
  %290 = vmatmul.f32.gmra.mxu0 %v215
  %v291 = vpop.f32.mrf.mxu0
  %v292 = vadd.f32 %v138, %v291
  %293 = vmatmul.f32.gmra.mxu0 %v218
  %v294 = vpop.f32.mrf.mxu0
  %v295 = vadd.f32 %v143, %v294
  %296 = vmatmul.f32.gmra.mxu0 %v221
  %v297 = vpop.f32.mrf.mxu0
  %v298 = vadd.f32 %v148, %v297
  %299 = vmatmul.f32.gmra.mxu0 %v224
  %v300 = vpop.f32.mrf.mxu0
  %v301 = vadd.f32 %v153, %v300
  %302 = vmatmul.f32.gmra.mxu0 %v227
  %v303 = vpop.f32.mrf.mxu0
  %v304 = vadd.f32 %v158, %v303
  %305 = vmatmul.f32.gmra.mxu0 %v230
  %v306 = vpop.f32.mrf.mxu0
  %v307 = vadd.f32 %v163, %v306
  %308 = vmatmul.f32.gmra.mxu0 %v233
  %v309 = vpop.f32.mrf.mxu0
  %v310 = vadd.f32 %v168, %v309
  %311 = vmatmul.f32.gmra.mxu0 %v236
  %v312 = vpop.f32.mrf.mxu0
  %v313 = vadd.f32 %v173, %v312
  %314 = vmatmul.f32.gmra.mxu0 %v239
  %v315 = vpop.f32.mrf.mxu0
  %v316 = vadd.f32 %v178, %v315
  %317 = vdwg.mxu0
  %v318 = vmax.f32 %v259, 0.0
  %v319 = vmax.f32 %v262, 0.0
  %v320 = vmax.f32 %v265, 0.0
  %v321 = vmax.f32 %v268, 0.0
  %v322 = vmax.f32 %v271, 0.0
  %v323 = vmax.f32 %v274, 0.0
  %v324 = vmax.f32 %v277, 0.0
  %v325 = vmax.f32 %v280, 0.0
  %v326 = vmax.f32 %v283, 0.0
  %v327 = vmax.f32 %v286, 0.0
  %v328 = vmax.f32 %v289, 0.0
  %v329 = vmax.f32 %v292, 0.0
  %v330 = vmax.f32 %v295, 0.0
  %v331 = vmax.f32 %v298, 0.0
  %v332 = vmax.f32 %v301, 0.0
  %v333 = vmax.f32 %v304, 0.0
  %v334 = vmax.f32 %v307, 0.0
  %v335 = vmax.f32 %v310, 0.0
  %v336 = vmax.f32 %v313, 0.0
  %v337 = vmax.f32 %v316, 0.0
  %v338 = vld [vmem:[%s3] sm:$0xff]
  %v339 = vld [vmem:[%s3 + $0x8] sm:$0xff]
  %v340 = vld [vmem:[%s3 + $0x10] sm:$0xff]
  %v341 = vld [vmem:[%s3 + $0x18] sm:$0xff]
  %v342 = vld [vmem:[%s3 + $0x20] sm:$0xff]
  %v343 = vld [vmem:[%s3 + $0x28] sm:$0xff]
  %v344 = vld [vmem:[%s3 + $0x30] sm:$0xff]
  %v345 = vld [vmem:[%s3 + $0x38] sm:$0xff]
  %v346 = vld [vmem:[%s3 + $0x40] sm:$0xff]
  %v347 = vld [vmem:[%s3 + $0x48] sm:$0xff]
  %v348 = vld [vmem:[%s3 + $0x50] sm:$0xff]
  %v349 = vld [vmem:[%s3 + $0x58] sm:$0xff]
  %v350 = vld [vmem:[%s3 + $0x60] sm:$0xff]
  %v351 = vld [vmem:[%s3 + $0x68] sm:$0xff]
  %v352 = vld [vmem:[%s3 + $0x70] sm:$0xff]
  %v353 = vld [vmem:[%s3 + $0x78] sm:$0xff]
  %v354 = vld [vmem:[%s3 + $0x80] sm:$0xff]
  %v355 = vld [vmem:[%s3 + $0x88] sm:$0xff]
  %v356 = vld [vmem:[%s3 + $0x90] sm:$0xff]
  %v357 = vld [vmem:[%s3 + $0x98] sm:$0xff]
  %v358 = vld [vmem:[%s3 + $0xa0] sm:$0xff]
  %v359 = vld [vmem:[%s3 + $0xa8] sm:$0xff]
  %v360 = vld [vmem:[%s3 + $0xb0] sm:$0xff]
  %v361 = vld [vmem:[%s3 + $0xb8] sm:$0xff]
  %v362 = vld [vmem:[%s3 + $0xc0] sm:$0xff]
  %v363 = vld [vmem:[%s3 + $0xc8] sm:$0xff]
  %v364 = vld [vmem:[%s3 + $0xd0] sm:$0xff]
  %v365 = vld [vmem:[%s3 + $0xd8] sm:$0xff]
  %v366 = vld [vmem:[%s3 + $0xe0] sm:$0xff]
  %v367 = vld [vmem:[%s3 + $0xe8] sm:$0xff]
  %v368 = vld [vmem:[%s3 + $0xf0] sm:$0xff]
  %v369 = vld [vmem:[%s3 + $0xf8] sm:$0xff]
  %v370 = vld [vmem:[%s3 + $0x100] sm:$0xff]
  %v371 = vld [vmem:[%s3 + $0x108] sm:$0xff]
  %v372 = vld [vmem:[%s3 + $0x110] sm:$0xff]
  %v373 = vld [vmem:[%s3 + $0x118] sm:$0xff]
  %v374 = vld [vmem:[%s3 + $0x120] sm:$0xff]
  %v375 = vld [vmem:[%s3 + $0x128] sm:$0xff]
  %v376 = vld [vmem:[%s3 + $0x130] sm:$0xff]
  %v377 = vld [vmem:[%s3 + $0x138] sm:$0xff]
  %v378 = vld [vmem:[%s4] sm:$0xff]
  %v379 = vld [vmem:[%s4 + $0x8] sm:$0xff]
  %v380 = vld [vmem:[%s4 + $0x10] sm:$0xff]
  %v381 = vld [vmem:[%s4 + $0x18] sm:$0xff]
  %v382 = vld [vmem:[%s4 + $0x20] sm:$0xff]
  %v383 = vld [vmem:[%s4 + $0x28] sm:$0xff]
  %v384 = vld [vmem:[%s4 + $0x30] sm:$0xff]
  %v385 = vld [vmem:[%s4 + $0x38] sm:$0xff]
  %v386 = vld [vmem:[%s4 + $0x40] sm:$0xff]
  %v387 = vld [vmem:[%s4 + $0x48] sm:$0xff]
  %v388 = vld [vmem:[%s4 + $0x50] sm:$0xff]
  %v389 = vld [vmem:[%s4 + $0x58] sm:$0xff]
  %v390 = vld [vmem:[%s4 + $0x60] sm:$0xff]
  %v391 = vld [vmem:[%s4 + $0x68] sm:$0xff]
  %v392 = vld [vmem:[%s4 + $0x70] sm:$0xff]
  %v393 = vld [vmem:[%s4 + $0x78] sm:$0xff]
  %v394 = vld [vmem:[%s4 + $0x80] sm:$0xff]
  %v395 = vld [vmem:[%s4 + $0x88] sm:$0xff]
  %v396 = vld [vmem:[%s4 + $0x90] sm:$0xff]
  %v397 = vld [vmem:[%s4 + $0x98] sm:$0xff]
  %399 = vset.pattern.permute.xlu0 0
  %400 = vperm.xlu0 %399, %v378
  %v401 = vpop.permute.xlu0 %400
  %404 = vset.pattern.permute.xlu0 0
  %405 = vperm.xlu0 %404, %v379
  %v406 = vpop.permute.xlu0 %405
  %409 = vset.pattern.permute.xlu0 0
  %410 = vperm.xlu0 %409, %v380
  %v411 = vpop.permute.xlu0 %410
  %414 = vset.pattern.permute.xlu0 0
  %415 = vperm.xlu0 %414, %v381
  %v416 = vpop.permute.xlu0 %415
  %419 = vset.pattern.permute.xlu0 0
  %420 = vperm.xlu0 %419, %v382
  %v421 = vpop.permute.xlu0 %420
  %424 = vset.pattern.permute.xlu0 0
  %425 = vperm.xlu0 %424, %v383
  %v426 = vpop.permute.xlu0 %425
  %429 = vset.pattern.permute.xlu0 0
  %430 = vperm.xlu0 %429, %v384
  %v431 = vpop.permute.xlu0 %430
  %434 = vset.pattern.permute.xlu0 0
  %435 = vperm.xlu0 %434, %v385
  %v436 = vpop.permute.xlu0 %435
  %439 = vset.pattern.permute.xlu0 0
  %440 = vperm.xlu0 %439, %v386
  %v441 = vpop.permute.xlu0 %440
  %444 = vset.pattern.permute.xlu0 0
  %445 = vperm.xlu0 %444, %v387
  %v446 = vpop.permute.xlu0 %445
  %449 = vset.pattern.permute.xlu0 0
  %450 = vperm.xlu0 %449, %v388
  %v451 = vpop.permute.xlu0 %450
  %454 = vset.pattern.permute.xlu0 0
  %455 = vperm.xlu0 %454, %v389
  %v456 = vpop.permute.xlu0 %455
  %459 = vset.pattern.permute.xlu0 0
  %460 = vperm.xlu0 %459, %v390
  %v461 = vpop.permute.xlu0 %460
  %464 = vset.pattern.permute.xlu0 0
  %465 = vperm.xlu0 %464, %v391
  %v466 = vpop.permute.xlu0 %465
  %469 = vset.pattern.permute.xlu0 0
  %470 = vperm.xlu0 %469, %v392
  %v471 = vpop.permute.xlu0 %470
  %474 = vset.pattern.permute.xlu0 0
  %475 = vperm.xlu0 %474, %v393
  %v476 = vpop.permute.xlu0 %475
  %479 = vset.pattern.permute.xlu0 0
  %480 = vperm.xlu0 %479, %v394
  %v481 = vpop.permute.xlu0 %480
  %484 = vset.pattern.permute.xlu0 0
  %485 = vperm.xlu0 %484, %v395
  %v486 = vpop.permute.xlu0 %485
  %489 = vset.pattern.permute.xlu0 0
  %490 = vperm.xlu0 %489, %v396
  %v491 = vpop.permute.xlu0 %490
  %494 = vset.pattern.permute.xlu0 0
  %495 = vperm.xlu0 %494, %v397
  %v496 = vpop.permute.xlu0 %495
  %vm498 = vcmask 261120
  %v500 = vsel %vm498, %v339, 0
  %v503 = vsel %vm498, %v341, 0
  %v506 = vsel %vm498, %v343, 0
  %v509 = vsel %vm498, %v345, 0
  %v512 = vsel %vm498, %v347, 0
  %v515 = vsel %vm498, %v349, 0
  %v518 = vsel %vm498, %v351, 0
  %v521 = vsel %vm498, %v353, 0
  %v524 = vsel %vm498, %v355, 0
  %v527 = vsel %vm498, %v357, 0
  %v530 = vsel %vm498, %v359, 0
  %v533 = vsel %vm498, %v361, 0
  %v536 = vsel %vm498, %v363, 0
  %v539 = vsel %vm498, %v365, 0
  %v542 = vsel %vm498, %v367, 0
  %v545 = vsel %vm498, %v369, 0
  %v548 = vsel %vm498, %v371, 0
  %v551 = vsel %vm498, %v373, 0
  %v554 = vsel %vm498, %v375, 0
  %v557 = vsel %vm498, %v377, 0
  %559 = vmatpush.msra.mxu0 %v333
  %560 = vmatpush.msra.mxu0 %v332
  %561 = vmatpush.msra.mxu0 %v331
  %562 = vmatpush.msra.mxu0 %v330
  %563 = vmatpush.msra.mxu0 %v329
  %564 = vmatpush.msra.mxu0 %v328
  %565 = vmatpush.msra.mxu0 %v327
  %566 = vmatpush.msra.mxu0 %v326
  %567 = vmatpush.msra.mxu0 %v325
  %568 = vmatpush.msra.mxu0 %v324
  %569 = vmatpush.msra.mxu0 %v323
  %570 = vmatpush.msra.mxu0 %v322
  %571 = vmatpush.msra.mxu0 %v321
  %572 = vmatpush.msra.mxu0 %v320
  %573 = vmatpush.msra.mxu0 %v319
  %574 = vmatpush.msra.mxu0 %v318
  %575 = vmatmul.f32.gmra.mxu0 %v338
  %v576 = vpop.f32.mrf.mxu0
  %v577 = vadd.f32 %v401, %v576
  %578 = vmatmul.f32.gmra.mxu0 %v340
  %v579 = vpop.f32.mrf.mxu0
  %v580 = vadd.f32 %v406, %v579
  %581 = vmatmul.f32.gmra.mxu0 %v342
  %v582 = vpop.f32.mrf.mxu0
  %v583 = vadd.f32 %v411, %v582
  %584 = vmatmul.f32.gmra.mxu0 %v344
  %v585 = vpop.f32.mrf.mxu0
  %v586 = vadd.f32 %v416, %v585
  %587 = vmatmul.f32.gmra.mxu0 %v346
  %v588 = vpop.f32.mrf.mxu0
  %v589 = vadd.f32 %v421, %v588
  %590 = vmatmul.f32.gmra.mxu0 %v348
  %v591 = vpop.f32.mrf.mxu0
  %v592 = vadd.f32 %v426, %v591
  %593 = vmatmul.f32.gmra.mxu0 %v350
  %v594 = vpop.f32.mrf.mxu0
  %v595 = vadd.f32 %v431, %v594
  %596 = vmatmul.f32.gmra.mxu0 %v352
  %v597 = vpop.f32.mrf.mxu0
  %v598 = vadd.f32 %v436, %v597
  %599 = vmatmul.f32.gmra.mxu0 %v354
  %v600 = vpop.f32.mrf.mxu0
  %v601 = vadd.f32 %v441, %v600
  %602 = vmatmul.f32.gmra.mxu0 %v356
  %v603 = vpop.f32.mrf.mxu0
  %v604 = vadd.f32 %v446, %v603
  %605 = vmatmul.f32.gmra.mxu0 %v358
  %v606 = vpop.f32.mrf.mxu0
  %v607 = vadd.f32 %v451, %v606
  %608 = vmatmul.f32.gmra.mxu0 %v360
  %v609 = vpop.f32.mrf.mxu0
  %v610 = vadd.f32 %v456, %v609
  %611 = vmatmul.f32.gmra.mxu0 %v362
  %v612 = vpop.f32.mrf.mxu0
  %v613 = vadd.f32 %v461, %v612
  %614 = vmatmul.f32.gmra.mxu0 %v364
  %v615 = vpop.f32.mrf.mxu0
  %v616 = vadd.f32 %v466, %v615
  %617 = vmatmul.f32.gmra.mxu0 %v366
  %v618 = vpop.f32.mrf.mxu0
  %v619 = vadd.f32 %v471, %v618
  %620 = vmatmul.f32.gmra.mxu0 %v368
  %v621 = vpop.f32.mrf.mxu0
  %v622 = vadd.f32 %v476, %v621
  %623 = vmatmul.f32.gmra.mxu0 %v370
  %v624 = vpop.f32.mrf.mxu0
  %v625 = vadd.f32 %v481, %v624
  %626 = vmatmul.f32.gmra.mxu0 %v372
  %v627 = vpop.f32.mrf.mxu0
  %v628 = vadd.f32 %v486, %v627
  %629 = vmatmul.f32.gmra.mxu0 %v374
  %v630 = vpop.f32.mrf.mxu0
  %v631 = vadd.f32 %v491, %v630
  %632 = vmatmul.f32.gmra.mxu0 %v376
  %v633 = vpop.f32.mrf.mxu0
  %v634 = vadd.f32 %v496, %v633
  %635 = vdwg.mxu0
  %636 = vmatpush.msra.mxu0 0.0
  %637 = vmatpush.msra.mxu0 0.0
  %638 = vmatpush.msra.mxu0 0.0
  %639 = vmatpush.msra.mxu0 0.0
  %640 = vmatpush.msra.mxu0 0.0
  %641 = vmatpush.msra.mxu0 0.0
  %642 = vmatpush.msra.mxu0 0.0
  %643 = vmatpush.msra.mxu0 0.0
  %644 = vmatpush.msra.mxu0 0.0
  %645 = vmatpush.msra.mxu0 0.0
  %646 = vmatpush.msra.mxu0 0.0
  %647 = vmatpush.msra.mxu0 0.0
  %648 = vmatpush.msra.mxu0 %v337
  %649 = vmatpush.msra.mxu0 %v336
  %650 = vmatpush.msra.mxu0 %v335
  %651 = vmatpush.msra.mxu0 %v334
  %652 = vmatmul.f32.gmra.mxu0 %v500
  %v653 = vpop.f32.mrf.mxu0
  %v654 = vadd.f32 %v577, %v653
  %655 = vmatmul.f32.gmra.mxu0 %v503
  %v656 = vpop.f32.mrf.mxu0
  %v657 = vadd.f32 %v580, %v656
  %658 = vmatmul.f32.gmra.mxu0 %v506
  %v659 = vpop.f32.mrf.mxu0
  %v660 = vadd.f32 %v583, %v659
  %661 = vmatmul.f32.gmra.mxu0 %v509
  %v662 = vpop.f32.mrf.mxu0
  %v663 = vadd.f32 %v586, %v662
  %664 = vmatmul.f32.gmra.mxu0 %v512
  %v665 = vpop.f32.mrf.mxu0
  %v666 = vadd.f32 %v589, %v665
  %667 = vmatmul.f32.gmra.mxu0 %v515
  %v668 = vpop.f32.mrf.mxu0
  %v669 = vadd.f32 %v592, %v668
  %670 = vmatmul.f32.gmra.mxu0 %v518
  %v671 = vpop.f32.mrf.mxu0
  %v672 = vadd.f32 %v595, %v671
  %673 = vmatmul.f32.gmra.mxu0 %v521
  %v674 = vpop.f32.mrf.mxu0
  %v675 = vadd.f32 %v598, %v674
  %676 = vmatmul.f32.gmra.mxu0 %v524
  %v677 = vpop.f32.mrf.mxu0
  %v678 = vadd.f32 %v601, %v677
  %679 = vmatmul.f32.gmra.mxu0 %v527
  %v680 = vpop.f32.mrf.mxu0
  %v681 = vadd.f32 %v604, %v680
  %682 = vmatmul.f32.gmra.mxu0 %v530
  %v683 = vpop.f32.mrf.mxu0
  %v684 = vadd.f32 %v607, %v683
  %685 = vmatmul.f32.gmra.mxu0 %v533
  %v686 = vpop.f32.mrf.mxu0
  %v687 = vadd.f32 %v610, %v686
  %688 = vmatmul.f32.gmra.mxu0 %v536
  %v689 = vpop.f32.mrf.mxu0
  %v690 = vadd.f32 %v613, %v689
  %691 = vmatmul.f32.gmra.mxu0 %v539
  %v692 = vpop.f32.mrf.mxu0
  %v693 = vadd.f32 %v616, %v692
  %694 = vmatmul.f32.gmra.mxu0 %v542
  %v695 = vpop.f32.mrf.mxu0
  %v696 = vadd.f32 %v619, %v695
  %697 = vmatmul.f32.gmra.mxu0 %v545
  %v698 = vpop.f32.mrf.mxu0
  %v699 = vadd.f32 %v622, %v698
  %700 = vmatmul.f32.gmra.mxu0 %v548
  %v701 = vpop.f32.mrf.mxu0
  %v702 = vadd.f32 %v625, %v701
  %703 = vmatmul.f32.gmra.mxu0 %v551
  %v704 = vpop.f32.mrf.mxu0
  %v705 = vadd.f32 %v628, %v704
  %706 = vmatmul.f32.gmra.mxu0 %v554
  %v707 = vpop.f32.mrf.mxu0
  %v708 = vadd.f32 %v631, %v707
  %709 = vmatmul.f32.gmra.mxu0 %v557
  %v710 = vpop.f32.mrf.mxu0
  %v711 = vadd.f32 %v634, %v710
  %712 = vdwg.mxu0
  %v713 = vmax.f32 %v654, 0.0
  %v714 = vmax.f32 %v657, 0.0
  %v715 = vmax.f32 %v660, 0.0
  %v716 = vmax.f32 %v663, 0.0
  %v717 = vmax.f32 %v666, 0.0
  %v718 = vmax.f32 %v669, 0.0
  %v719 = vmax.f32 %v672, 0.0
  %v720 = vmax.f32 %v675, 0.0
  %v721 = vmax.f32 %v678, 0.0
  %v722 = vmax.f32 %v681, 0.0
  %v723 = vmax.f32 %v684, 0.0
  %v724 = vmax.f32 %v687, 0.0
  %v725 = vmax.f32 %v690, 0.0
  %v726 = vmax.f32 %v693, 0.0
  %v727 = vmax.f32 %v696, 0.0
  %v728 = vmax.f32 %v699, 0.0
  %v729 = vmax.f32 %v702, 0.0
  %v730 = vmax.f32 %v705, 0.0
  %v731 = vmax.f32 %v708, 0.0
  %v732 = vmax.f32 %v711, 0.0
  %v733 = vld [vmem:[%s5] sm:$0xff]
  %v734 = vld [vmem:[%s5 + $0x8] sm:$0xff]
  %v735 = vld [vmem:[%s5 + $0x10] sm:$0xff]
  %v736 = vld [vmem:[%s5 + $0x18] sm:$0xff]
  %v737 = vld [vmem:[%s5 + $0x20] sm:$0xff]
  %v738 = vld [vmem:[%s5 + $0x28] sm:$0xff]
  %v739 = vld [vmem:[%s5 + $0x30] sm:$0xff]
  %v740 = vld [vmem:[%s5 + $0x38] sm:$0xff]
  %v741 = vld [vmem:[%s5 + $0x40] sm:$0xff]
  %v742 = vld [vmem:[%s5 + $0x48] sm:$0xff]
  %v743 = vld [vmem:[%s5 + $0x50] sm:$0xff]
  %v744 = vld [vmem:[%s5 + $0x58] sm:$0xff]
  %v745 = vld [vmem:[%s5 + $0x60] sm:$0xff]
  %v746 = vld [vmem:[%s5 + $0x68] sm:$0xff]
  %v747 = vld [vmem:[%s5 + $0x70] sm:$0xff]
  %v748 = vld [vmem:[%s5 + $0x78] sm:$0xff]
  %v749 = vld [vmem:[%s5 + $0x80] sm:$0xff]
  %v750 = vld [vmem:[%s5 + $0x88] sm:$0xff]
  %v751 = vld [vmem:[%s5 + $0x90] sm:$0xff]
  %v752 = vld [vmem:[%s5 + $0x98] sm:$0xff]
  %v753 = vld [vmem:[%s5 + $0xa0] sm:$0xff]
  %v754 = vld [vmem:[%s5 + $0xa8] sm:$0xff]
  %v755 = vld [vmem:[%s5 + $0xb0] sm:$0xff]
  %v756 = vld [vmem:[%s5 + $0xb8] sm:$0xff]
  %v757 = vld [vmem:[%s5 + $0xc0] sm:$0xff]
  %v758 = vld [vmem:[%s5 + $0xc8] sm:$0xff]
  %v759 = vld [vmem:[%s5 + $0xd0] sm:$0xff]
  %v760 = vld [vmem:[%s5 + $0xd8] sm:$0xff]
  %v761 = vld [vmem:[%s5 + $0xe0] sm:$0xff]
  %v762 = vld [vmem:[%s5 + $0xe8] sm:$0xff]
  %v763 = vld [vmem:[%s5 + $0xf0] sm:$0xff]
  %v764 = vld [vmem:[%s5 + $0xf8] sm:$0xff]
  %v765 = vld [vmem:[%s5 + $0x100] sm:$0xff]
  %v766 = vld [vmem:[%s5 + $0x108] sm:$0xff]
  %v767 = vld [vmem:[%s5 + $0x110] sm:$0xff]
  %v768 = vld [vmem:[%s5 + $0x118] sm:$0xff]
  %v769 = vld [vmem:[%s5 + $0x120] sm:$0xff]
  %v770 = vld [vmem:[%s5 + $0x128] sm:$0xff]
  %v771 = vld [vmem:[%s5 + $0x130] sm:$0xff]
  %v772 = vld [vmem:[%s5 + $0x138] sm:$0xff]
  %v773 = vld [vmem:[%s6] sm:$0xff]
  %v774 = vld [vmem:[%s6 + $0x8] sm:$0xff]
  %v775 = vld [vmem:[%s6 + $0x10] sm:$0xff]
  %v776 = vld [vmem:[%s6 + $0x18] sm:$0xff]
  %v777 = vld [vmem:[%s6 + $0x20] sm:$0xff]
  %v778 = vld [vmem:[%s6 + $0x28] sm:$0xff]
  %v779 = vld [vmem:[%s6 + $0x30] sm:$0xff]
  %v780 = vld [vmem:[%s6 + $0x38] sm:$0xff]
  %v781 = vld [vmem:[%s6 + $0x40] sm:$0xff]
  %v782 = vld [vmem:[%s6 + $0x48] sm:$0xff]
  %v783 = vld [vmem:[%s6 + $0x50] sm:$0xff]
  %v784 = vld [vmem:[%s6 + $0x58] sm:$0xff]
  %v785 = vld [vmem:[%s6 + $0x60] sm:$0xff]
  %v786 = vld [vmem:[%s6 + $0x68] sm:$0xff]
  %v787 = vld [vmem:[%s6 + $0x70] sm:$0xff]
  %v788 = vld [vmem:[%s6 + $0x78] sm:$0xff]
  %v789 = vld [vmem:[%s6 + $0x80] sm:$0xff]
  %v790 = vld [vmem:[%s6 + $0x88] sm:$0xff]
  %v791 = vld [vmem:[%s6 + $0x90] sm:$0xff]
  %v792 = vld [vmem:[%s6 + $0x98] sm:$0xff]
  %794 = vset.pattern.permute.xlu0 0
  %795 = vperm.xlu0 %794, %v773
  %v796 = vpop.permute.xlu0 %795
  %799 = vset.pattern.permute.xlu0 0
  %800 = vperm.xlu0 %799, %v774
  %v801 = vpop.permute.xlu0 %800
  %804 = vset.pattern.permute.xlu0 0
  %805 = vperm.xlu0 %804, %v775
  %v806 = vpop.permute.xlu0 %805
  %809 = vset.pattern.permute.xlu0 0
  %810 = vperm.xlu0 %809, %v776
  %v811 = vpop.permute.xlu0 %810
  %814 = vset.pattern.permute.xlu0 0
  %815 = vperm.xlu0 %814, %v777
  %v816 = vpop.permute.xlu0 %815
  %819 = vset.pattern.permute.xlu0 0
  %820 = vperm.xlu0 %819, %v778
  %v821 = vpop.permute.xlu0 %820
  %824 = vset.pattern.permute.xlu0 0
  %825 = vperm.xlu0 %824, %v779
  %v826 = vpop.permute.xlu0 %825
  %829 = vset.pattern.permute.xlu0 0
  %830 = vperm.xlu0 %829, %v780
  %v831 = vpop.permute.xlu0 %830
  %834 = vset.pattern.permute.xlu0 0
  %835 = vperm.xlu0 %834, %v781
  %v836 = vpop.permute.xlu0 %835
  %839 = vset.pattern.permute.xlu0 0
  %840 = vperm.xlu0 %839, %v782
  %v841 = vpop.permute.xlu0 %840
  %844 = vset.pattern.permute.xlu0 0
  %845 = vperm.xlu0 %844, %v783
  %v846 = vpop.permute.xlu0 %845
  %849 = vset.pattern.permute.xlu0 0
  %850 = vperm.xlu0 %849, %v784
  %v851 = vpop.permute.xlu0 %850
  %854 = vset.pattern.permute.xlu0 0
  %855 = vperm.xlu0 %854, %v785
  %v856 = vpop.permute.xlu0 %855
  %859 = vset.pattern.permute.xlu0 0
  %860 = vperm.xlu0 %859, %v786
  %v861 = vpop.permute.xlu0 %860
  %864 = vset.pattern.permute.xlu0 0
  %865 = vperm.xlu0 %864, %v787
  %v866 = vpop.permute.xlu0 %865
  %869 = vset.pattern.permute.xlu0 0
  %870 = vperm.xlu0 %869, %v788
  %v871 = vpop.permute.xlu0 %870
  %874 = vset.pattern.permute.xlu0 0
  %875 = vperm.xlu0 %874, %v789
  %v876 = vpop.permute.xlu0 %875
  %879 = vset.pattern.permute.xlu0 0
  %880 = vperm.xlu0 %879, %v790
  %v881 = vpop.permute.xlu0 %880
  %884 = vset.pattern.permute.xlu0 0
  %885 = vperm.xlu0 %884, %v791
  %v886 = vpop.permute.xlu0 %885
  %889 = vset.pattern.permute.xlu0 0
  %890 = vperm.xlu0 %889, %v792
  %v891 = vpop.permute.xlu0 %890
  %v894 = vsel %vm498, %v734, 0
  %v897 = vsel %vm498, %v736, 0
  %v900 = vsel %vm498, %v738, 0
  %v903 = vsel %vm498, %v740, 0
  %v906 = vsel %vm498, %v742, 0
  %v909 = vsel %vm498, %v744, 0
  %v912 = vsel %vm498, %v746, 0
  %v915 = vsel %vm498, %v748, 0
  %v918 = vsel %vm498, %v750, 0
  %v921 = vsel %vm498, %v752, 0
  %v924 = vsel %vm498, %v754, 0
  %v927 = vsel %vm498, %v756, 0
  %v930 = vsel %vm498, %v758, 0
  %v933 = vsel %vm498, %v760, 0
  %v936 = vsel %vm498, %v762, 0
  %v939 = vsel %vm498, %v764, 0
  %v942 = vsel %vm498, %v766, 0
  %v945 = vsel %vm498, %v768, 0
  %v948 = vsel %vm498, %v770, 0
  %v951 = vsel %vm498, %v772, 0
  %953 = vmatpush.msra.mxu0 %v728
  %954 = vmatpush.msra.mxu0 %v727
  %955 = vmatpush.msra.mxu0 %v726
  %956 = vmatpush.msra.mxu0 %v725
  %957 = vmatpush.msra.mxu0 %v724
  %958 = vmatpush.msra.mxu0 %v723
  %959 = vmatpush.msra.mxu0 %v722
  %960 = vmatpush.msra.mxu0 %v721
  %961 = vmatpush.msra.mxu0 %v720
  %962 = vmatpush.msra.mxu0 %v719
  %963 = vmatpush.msra.mxu0 %v718
  %964 = vmatpush.msra.mxu0 %v717
  %965 = vmatpush.msra.mxu0 %v716
  %966 = vmatpush.msra.mxu0 %v715
  %967 = vmatpush.msra.mxu0 %v714
  %968 = vmatpush.msra.mxu0 %v713
  %969 = vmatmul.f32.gmra.mxu0 %v733
  %v970 = vpop.f32.mrf.mxu0
  %v971 = vadd.f32 %v796, %v970
  %972 = vmatmul.f32.gmra.mxu0 %v735
  %v973 = vpop.f32.mrf.mxu0
  %v974 = vadd.f32 %v801, %v973
  %975 = vmatmul.f32.gmra.mxu0 %v737
  %v976 = vpop.f32.mrf.mxu0
  %v977 = vadd.f32 %v806, %v976
  %978 = vmatmul.f32.gmra.mxu0 %v739
  %v979 = vpop.f32.mrf.mxu0
  %v980 = vadd.f32 %v811, %v979
  %981 = vmatmul.f32.gmra.mxu0 %v741
  %v982 = vpop.f32.mrf.mxu0
  %v983 = vadd.f32 %v816, %v982
  %984 = vmatmul.f32.gmra.mxu0 %v743
  %v985 = vpop.f32.mrf.mxu0
  %v986 = vadd.f32 %v821, %v985
  %987 = vmatmul.f32.gmra.mxu0 %v745
  %v988 = vpop.f32.mrf.mxu0
  %v989 = vadd.f32 %v826, %v988
  %990 = vmatmul.f32.gmra.mxu0 %v747
  %v991 = vpop.f32.mrf.mxu0
  %v992 = vadd.f32 %v831, %v991
  %993 = vmatmul.f32.gmra.mxu0 %v749
  %v994 = vpop.f32.mrf.mxu0
  %v995 = vadd.f32 %v836, %v994
  %996 = vmatmul.f32.gmra.mxu0 %v751
  %v997 = vpop.f32.mrf.mxu0
  %v998 = vadd.f32 %v841, %v997
  %999 = vmatmul.f32.gmra.mxu0 %v753
  %v1000 = vpop.f32.mrf.mxu0
  %v1001 = vadd.f32 %v846, %v1000
  %1002 = vmatmul.f32.gmra.mxu0 %v755
  %v1003 = vpop.f32.mrf.mxu0
  %v1004 = vadd.f32 %v851, %v1003
  %1005 = vmatmul.f32.gmra.mxu0 %v757
  %v1006 = vpop.f32.mrf.mxu0
  %v1007 = vadd.f32 %v856, %v1006
  %1008 = vmatmul.f32.gmra.mxu0 %v759
  %v1009 = vpop.f32.mrf.mxu0
  %v1010 = vadd.f32 %v861, %v1009
  %1011 = vmatmul.f32.gmra.mxu0 %v761
  %v1012 = vpop.f32.mrf.mxu0
  %v1013 = vadd.f32 %v866, %v1012
  %1014 = vmatmul.f32.gmra.mxu0 %v763
  %v1015 = vpop.f32.mrf.mxu0
  %v1016 = vadd.f32 %v871, %v1015
  %1017 = vmatmul.f32.gmra.mxu0 %v765
  %v1018 = vpop.f32.mrf.mxu0
  %v1019 = vadd.f32 %v876, %v1018
  %1020 = vmatmul.f32.gmra.mxu0 %v767
  %v1021 = vpop.f32.mrf.mxu0
  %v1022 = vadd.f32 %v881, %v1021
  %1023 = vmatmul.f32.gmra.mxu0 %v769
  %v1024 = vpop.f32.mrf.mxu0
  %v1025 = vadd.f32 %v886, %v1024
  %1026 = vmatmul.f32.gmra.mxu0 %v771
  %v1027 = vpop.f32.mrf.mxu0
  %v1028 = vadd.f32 %v891, %v1027
  %1029 = vdwg.mxu0
  %1030 = vmatpush.msra.mxu0 0.0
  %1031 = vmatpush.msra.mxu0 0.0
  %1032 = vmatpush.msra.mxu0 0.0
  %1033 = vmatpush.msra.mxu0 0.0
  %1034 = vmatpush.msra.mxu0 0.0
  %1035 = vmatpush.msra.mxu0 0.0
  %1036 = vmatpush.msra.mxu0 0.0
  %1037 = vmatpush.msra.mxu0 0.0
  %1038 = vmatpush.msra.mxu0 0.0
  %1039 = vmatpush.msra.mxu0 0.0
  %1040 = vmatpush.msra.mxu0 0.0
  %1041 = vmatpush.msra.mxu0 0.0
  %1042 = vmatpush.msra.mxu0 %v732
  %1043 = vmatpush.msra.mxu0 %v731
  %1044 = vmatpush.msra.mxu0 %v730
  %1045 = vmatpush.msra.mxu0 %v729
  %1046 = vmatmul.f32.gmra.mxu0 %v894
  %v1047 = vpop.f32.mrf.mxu0
  %v1048 = vadd.f32 %v971, %v1047
  %1049 = vmatmul.f32.gmra.mxu0 %v897
  %v1050 = vpop.f32.mrf.mxu0
  %v1051 = vadd.f32 %v974, %v1050
  %1052 = vmatmul.f32.gmra.mxu0 %v900
  %v1053 = vpop.f32.mrf.mxu0
  %v1054 = vadd.f32 %v977, %v1053
  %1055 = vmatmul.f32.gmra.mxu0 %v903
  %v1056 = vpop.f32.mrf.mxu0
  %v1057 = vadd.f32 %v980, %v1056
  %1058 = vmatmul.f32.gmra.mxu0 %v906
  %v1059 = vpop.f32.mrf.mxu0
  %v1060 = vadd.f32 %v983, %v1059
  %1061 = vmatmul.f32.gmra.mxu0 %v909
  %v1062 = vpop.f32.mrf.mxu0
  %v1063 = vadd.f32 %v986, %v1062
  %1064 = vmatmul.f32.gmra.mxu0 %v912
  %v1065 = vpop.f32.mrf.mxu0
  %v1066 = vadd.f32 %v989, %v1065
  %1067 = vmatmul.f32.gmra.mxu0 %v915
  %v1068 = vpop.f32.mrf.mxu0
  %v1069 = vadd.f32 %v992, %v1068
  %1070 = vmatmul.f32.gmra.mxu0 %v918
  %v1071 = vpop.f32.mrf.mxu0
  %v1072 = vadd.f32 %v995, %v1071
  %1073 = vmatmul.f32.gmra.mxu0 %v921
  %v1074 = vpop.f32.mrf.mxu0
  %v1075 = vadd.f32 %v998, %v1074
  %1076 = vmatmul.f32.gmra.mxu0 %v924
  %v1077 = vpop.f32.mrf.mxu0
  %v1078 = vadd.f32 %v1001, %v1077
  %1079 = vmatmul.f32.gmra.mxu0 %v927
  %v1080 = vpop.f32.mrf.mxu0
  %v1081 = vadd.f32 %v1004, %v1080
  %1082 = vmatmul.f32.gmra.mxu0 %v930
  %v1083 = vpop.f32.mrf.mxu0
  %v1084 = vadd.f32 %v1007, %v1083
  %1085 = vmatmul.f32.gmra.mxu0 %v933
  %v1086 = vpop.f32.mrf.mxu0
  %v1087 = vadd.f32 %v1010, %v1086
  %1088 = vmatmul.f32.gmra.mxu0 %v936
  %v1089 = vpop.f32.mrf.mxu0
  %v1090 = vadd.f32 %v1013, %v1089
  %1091 = vmatmul.f32.gmra.mxu0 %v939
  %v1092 = vpop.f32.mrf.mxu0
  %v1093 = vadd.f32 %v1016, %v1092
  %1094 = vmatmul.f32.gmra.mxu0 %v942
  %v1095 = vpop.f32.mrf.mxu0
  %v1096 = vadd.f32 %v1019, %v1095
  %1097 = vmatmul.f32.gmra.mxu0 %v945
  %v1098 = vpop.f32.mrf.mxu0
  %v1099 = vadd.f32 %v1022, %v1098
  %1100 = vmatmul.f32.gmra.mxu0 %v948
  %v1101 = vpop.f32.mrf.mxu0
  %v1102 = vadd.f32 %v1025, %v1101
  %1103 = vmatmul.f32.gmra.mxu0 %v951
  %v1104 = vpop.f32.mrf.mxu0
  %v1105 = vadd.f32 %v1028, %v1104
  %1106 = vdwg.mxu0
  %v1107 = vmax.f32 %v1048, 0.0
  %v1108 = vmax.f32 %v1051, 0.0
  %v1109 = vmax.f32 %v1054, 0.0
  %v1110 = vmax.f32 %v1057, 0.0
  %v1111 = vmax.f32 %v1060, 0.0
  %v1112 = vmax.f32 %v1063, 0.0
  %v1113 = vmax.f32 %v1066, 0.0
  %v1114 = vmax.f32 %v1069, 0.0
  %v1115 = vmax.f32 %v1072, 0.0
  %v1116 = vmax.f32 %v1075, 0.0
  %v1117 = vmax.f32 %v1078, 0.0
  %v1118 = vmax.f32 %v1081, 0.0
  %v1119 = vmax.f32 %v1084, 0.0
  %v1120 = vmax.f32 %v1087, 0.0
  %v1121 = vmax.f32 %v1090, 0.0
  %v1122 = vmax.f32 %v1093, 0.0
  %v1123 = vmax.f32 %v1096, 0.0
  %v1124 = vmax.f32 %v1099, 0.0
  %v1125 = vmax.f32 %v1102, 0.0
  %v1126 = vmax.f32 %v1105, 0.0
  %v1127 = vld [vmem:[%s7] sm:$0xff]
  %v1128 = vld [vmem:[%s7 + $0x8] sm:$0xff]
  %v1129 = vld [vmem:[%s7 + $0x10] sm:$0xff]
  %v1130 = vld [vmem:[%s7 + $0x18] sm:$0xff]
  %v1131 = vld [vmem:[%s7 + $0x20] sm:$0xff]
  %v1132 = vld [vmem:[%s7 + $0x28] sm:$0xff]
  %v1133 = vld [vmem:[%s7 + $0x30] sm:$0xff]
  %v1134 = vld [vmem:[%s7 + $0x38] sm:$0xff]
  %v1135 = vld [vmem:[%s7 + $0x40] sm:$0xff]
  %v1136 = vld [vmem:[%s7 + $0x48] sm:$0xff]
  %v1137 = vld [vmem:[%s7 + $0x50] sm:$0xff]
  %v1138 = vld [vmem:[%s7 + $0x58] sm:$0xff]
  %v1139 = vld [vmem:[%s7 + $0x60] sm:$0xff]
  %v1140 = vld [vmem:[%s7 + $0x68] sm:$0xff]
  %v1141 = vld [vmem:[%s7 + $0x70] sm:$0xff]
  %v1142 = vld [vmem:[%s7 + $0x78] sm:$0xff]
  %v1143 = vld [vmem:[%s8] sm:$0xff]
  %v1144 = vld [vmem:[%s8 + $0x8] sm:$0xff]
  %v1145 = vld [vmem:[%s8 + $0x10] sm:$0xff]
  %v1146 = vld [vmem:[%s8 + $0x18] sm:$0xff]
  %v1147 = vld [vmem:[%s8 + $0x20] sm:$0xff]
  %v1148 = vld [vmem:[%s8 + $0x28] sm:$0xff]
  %v1149 = vld [vmem:[%s8 + $0x30] sm:$0xff]
  %v1150 = vld [vmem:[%s8 + $0x38] sm:$0xff]
  %1152 = vset.pattern.permute.xlu0 0
  %1153 = vperm.xlu0 %1152, %v1143
  %v1154 = vpop.permute.xlu0 %1153
  %1157 = vset.pattern.permute.xlu0 0
  %1158 = vperm.xlu0 %1157, %v1144
  %v1159 = vpop.permute.xlu0 %1158
  %1162 = vset.pattern.permute.xlu0 0
  %1163 = vperm.xlu0 %1162, %v1145
  %v1164 = vpop.permute.xlu0 %1163
  %1167 = vset.pattern.permute.xlu0 0
  %1168 = vperm.xlu0 %1167, %v1146
  %v1169 = vpop.permute.xlu0 %1168
  %1172 = vset.pattern.permute.xlu0 0
  %1173 = vperm.xlu0 %1172, %v1147
  %v1174 = vpop.permute.xlu0 %1173
  %1177 = vset.pattern.permute.xlu0 0
  %1178 = vperm.xlu0 %1177, %v1148
  %v1179 = vpop.permute.xlu0 %1178
  %1182 = vset.pattern.permute.xlu0 0
  %1183 = vperm.xlu0 %1182, %v1149
  %v1184 = vpop.permute.xlu0 %1183
  %1187 = vset.pattern.permute.xlu0 0
  %1188 = vperm.xlu0 %1187, %v1150
  %v1189 = vpop.permute.xlu0 %1188
  %v1192 = vsel %vm498, %v1128, 0
  %v1195 = vsel %vm498, %v1130, 0
  %v1198 = vsel %vm498, %v1132, 0
  %v1201 = vsel %vm498, %v1134, 0
  %v1204 = vsel %vm498, %v1136, 0
  %v1207 = vsel %vm498, %v1138, 0
  %v1210 = vsel %vm498, %v1140, 0
  %v1213 = vsel %vm498, %v1142, 0
  %1215 = vmatpush.msra.mxu0 %v1122
  %1216 = vmatpush.msra.mxu0 %v1121
  %1217 = vmatpush.msra.mxu0 %v1120
  %1218 = vmatpush.msra.mxu0 %v1119
  %1219 = vmatpush.msra.mxu0 %v1118
  %1220 = vmatpush.msra.mxu0 %v1117
  %1221 = vmatpush.msra.mxu0 %v1116
  %1222 = vmatpush.msra.mxu0 %v1115
  %1223 = vmatpush.msra.mxu0 %v1114
  %1224 = vmatpush.msra.mxu0 %v1113
  %1225 = vmatpush.msra.mxu0 %v1112
  %1226 = vmatpush.msra.mxu0 %v1111
  %1227 = vmatpush.msra.mxu0 %v1110
  %1228 = vmatpush.msra.mxu0 %v1109
  %1229 = vmatpush.msra.mxu0 %v1108
  %1230 = vmatpush.msra.mxu0 %v1107
  %1231 = vmatmul.f32.gmra.mxu0 %v1127
  %v1232 = vpop.f32.mrf.mxu0
  %v1233 = vadd.f32 %v1154, %v1232
  %1234 = vmatmul.f32.gmra.mxu0 %v1129
  %v1235 = vpop.f32.mrf.mxu0
  %v1236 = vadd.f32 %v1159, %v1235
  %1237 = vmatmul.f32.gmra.mxu0 %v1131
  %v1238 = vpop.f32.mrf.mxu0
  %v1239 = vadd.f32 %v1164, %v1238
  %1240 = vmatmul.f32.gmra.mxu0 %v1133
  %v1241 = vpop.f32.mrf.mxu0
  %v1242 = vadd.f32 %v1169, %v1241
  %1243 = vmatmul.f32.gmra.mxu0 %v1135
  %v1244 = vpop.f32.mrf.mxu0
  %v1245 = vadd.f32 %v1174, %v1244
  %1246 = vmatmul.f32.gmra.mxu0 %v1137
  %v1247 = vpop.f32.mrf.mxu0
  %v1248 = vadd.f32 %v1179, %v1247
  %1249 = vmatmul.f32.gmra.mxu0 %v1139
  %v1250 = vpop.f32.mrf.mxu0
  %v1251 = vadd.f32 %v1184, %v1250
  %1252 = vmatmul.f32.gmra.mxu0 %v1141
  %v1253 = vpop.f32.mrf.mxu0
  %v1254 = vadd.f32 %v1189, %v1253
  %1255 = vdwg.mxu0
  %1256 = vmatpush.msra.mxu0 0.0
  %1257 = vmatpush.msra.mxu0 0.0
  %1258 = vmatpush.msra.mxu0 0.0
  %1259 = vmatpush.msra.mxu0 0.0
  %1260 = vmatpush.msra.mxu0 0.0
  %1261 = vmatpush.msra.mxu0 0.0
  %1262 = vmatpush.msra.mxu0 0.0
  %1263 = vmatpush.msra.mxu0 0.0
  %1264 = vmatpush.msra.mxu0 0.0
  %1265 = vmatpush.msra.mxu0 0.0
  %1266 = vmatpush.msra.mxu0 0.0
  %1267 = vmatpush.msra.mxu0 0.0
  %1268 = vmatpush.msra.mxu0 %v1126
  %1269 = vmatpush.msra.mxu0 %v1125
  %1270 = vmatpush.msra.mxu0 %v1124
  %1271 = vmatpush.msra.mxu0 %v1123
  %1272 = vmatmul.f32.gmra.mxu0 %v1192
  %v1273 = vpop.f32.mrf.mxu0
  %v1274 = vadd.f32 %v1233, %v1273
  %1275 = vmatmul.f32.gmra.mxu0 %v1195
  %v1276 = vpop.f32.mrf.mxu0
  %v1277 = vadd.f32 %v1236, %v1276
  %1278 = vmatmul.f32.gmra.mxu0 %v1198
  %v1279 = vpop.f32.mrf.mxu0
  %v1280 = vadd.f32 %v1239, %v1279
  %1281 = vmatmul.f32.gmra.mxu0 %v1201
  %v1282 = vpop.f32.mrf.mxu0
  %v1283 = vadd.f32 %v1242, %v1282
  %1284 = vmatmul.f32.gmra.mxu0 %v1204
  %v1285 = vpop.f32.mrf.mxu0
  %v1286 = vadd.f32 %v1245, %v1285
  %1287 = vmatmul.f32.gmra.mxu0 %v1207
  %v1288 = vpop.f32.mrf.mxu0
  %v1289 = vadd.f32 %v1248, %v1288
  %1290 = vmatmul.f32.gmra.mxu0 %v1210
  %v1291 = vpop.f32.mrf.mxu0
  %v1292 = vadd.f32 %v1251, %v1291
  %1293 = vmatmul.f32.gmra.mxu0 %v1213
  %v1294 = vpop.f32.mrf.mxu0
  %v1295 = vadd.f32 %v1254, %v1294
  %1296 = vdwg.mxu0
  %v1297 = vmax.f32 %v1274, 0.0
  %v1298 = vmax.f32 %v1277, 0.0
  %v1299 = vmax.f32 %v1280, 0.0
  %v1300 = vmax.f32 %v1283, 0.0
  %v1301 = vmax.f32 %v1286, 0.0
  %v1302 = vmax.f32 %v1289, 0.0
  %v1303 = vmax.f32 %v1292, 0.0
  %v1304 = vmax.f32 %v1295, 0.0
  %v1305 = vld [vmem:[%s9] sm:$0xff]
  %v1306 = vld [vmem:[%s10] sm:$0xff]
  %1308 = vset.pattern.permute.xlu0 0
  %1309 = vperm.xlu0 %1308, %v1306
  %v1310 = vpop.permute.xlu0 %1309
  %vm1312 = vcmask 523264
  %v1314 = vsel %vm1312, %v1305, 0
  %1316 = vmatpush.msra.mxu0 0.0
  %1317 = vmatpush.msra.mxu0 0.0
  %1318 = vmatpush.msra.mxu0 0.0
  %1319 = vmatpush.msra.mxu0 0.0
  %1320 = vmatpush.msra.mxu0 0.0
  %1321 = vmatpush.msra.mxu0 0.0
  %1322 = vmatpush.msra.mxu0 0.0
  %1323 = vmatpush.msra.mxu0 0.0
  %1324 = vmatpush.msra.mxu0 %v1304
  %1325 = vmatpush.msra.mxu0 %v1303
  %1326 = vmatpush.msra.mxu0 %v1302
  %1327 = vmatpush.msra.mxu0 %v1301
  %1328 = vmatpush.msra.mxu0 %v1300
  %1329 = vmatpush.msra.mxu0 %v1299
  %1330 = vmatpush.msra.mxu0 %v1298
  %1331 = vmatpush.msra.mxu0 %v1297
  %1332 = vmatmul.f32.gmra.mxu0 %v1314
  %v1333 = vpop.f32.mrf.mxu0
  %v1334 = vadd.f32 %v1310, %v1333
  %1335 = vdwg.mxu0
  %v1336 = vmax.f32 %v1334, 0.0
  %v1337 = vsub.f32 0.0, %v1336
  %v1338 = vmul.f32 %v1337, 1.442695
  %v1339 = vpow.pop %v1338
  %v1340 = vadd.f32 %v1339, 1.0
  %v1341 = vrcp.pop %v1340
  %v1342 = vmul.f32 %v1340, %v1341
  %v1343 = vsub.f32 1.0, %v1342
  %v1344 = vmul.f32 %v1341, %v1343
  %v1345 = vadd.f32 %v1341, %v1344
  %vm1346 = vweird.f32 %v1340
  %vm1347 = vweird.f32 %v1341
  %vm1348 = vmor %vm1346, %vm1347
  %v1349 = vsel %vm1348, %v1341, %v1345
  %v1350 = vand.u32 2147483647, %v1340
  %vm1351 = vcmp.eq.f32.partialorder %v1350, 8.507059e+37
  %v1352 = vand.u32 %v1340, 2147483648
  %v1353 = vor.u32 1.1754944e-38, %v1352
  %v1354 = vsel %vm1351, %v1353, %v1349
  %v1355 = vmul.f32 1.0, %v1354
  %v1356 = vmul.f32 %v1355, 2.0
  %v1357 = vadd.f32 %v1356, -1.0
  %1358 = vst [vmem:[%s11] sm:$0xff] %v1357
  // Predicated region
  $region46: #{cnn_forward.1} parent=0 // pred_check
    _
  $region47: #{cnn_forward.1} parent=0 // pred_check_branch
    %1360 = sbr.rel (0) target = $region49
  $region48: #{cnn_forward.1} parent=0 // pred_region
    _
  $region49: #{cnn_forward.1} parent=0 // pred_fallthru
    _
  // Predicated region
  $region50: #{cnn_forward.1} parent=0 // pred_check
    _
  $region51: #{cnn_forward.1} parent=0 // pred_check_branch
    %1362 = sbr.rel (0) target = $region53
  $region52: #{cnn_forward.1} parent=0 // pred_region
    _
  $region53: #{cnn_forward.1} parent=0 // pred_fallthru
    _

</llo_original>
